<compile_context>
chip_gen: v7x
topology: tpu7x:2x2x1
jax: 0.10.0
libtpu: 0.0.40
codegen_flags: <defaults>
</compile_context>

<pallas_src>
import functools

import jax
import jax.numpy as jnp
import numpy as np
from jax.experimental import pallas as pl
from jax.experimental.pallas import tpu as pltpu


def trescal_scores_kernel(tmp_ref, te_ref, ent_ref, w_ref, b_ref, pred_ref):
    """Scores of every query against one tile of entities.

    tmp_ref : (B, 1, R)   tmp[b] = lhs[b] @ rel[b]            (rank on lanes)
    te_ref  : (B, R, 1)   time embedding per query            (rank on sublanes)
    ent_ref : (R, TN)     entity embeddings, entities on lanes
    w_ref   : (R, TN)     W table, entities on lanes
    b_ref   : (R, TN)     b table, entities on lanes
    pred_ref: (B, 1, TN)  scores for this entity tile
    """
    batch = te_ref.shape[0]

    def per_query(b, carry):
        te_b = te_ref[b]                                        # (R, 1)
        # Single fused elementwise pass over the tile:
        #   rhs[r, e] = E[e, r] * sin(W[e, r] * te[b, r] + b[e, r])
        rhs = ent_ref[...] * jnp.sin(w_ref[...] * te_b + b_ref[...])   # (R, TN)
        # scores[b, e] = sum_r tmp[b, r] * rhs[r, e]   -> (1, TN) on the MXU
        pred_ref[b] = jnp.dot(tmp_ref[b], rhs,
                              preferred_element_type=jnp.float32)
        return carry

    jax.lax.fori_loop(0, batch, per_query, None)


def _round_up(x, m):
    return (x + m - 1) // m * m


def trescal_forward(x, ent_w, rel_w, te_w, W_w, b_w, *, rank, tn=1024,
                    buffers=None):
    """Pallas implementation of TRESCAL.forward.

    x: (B, 4) int32 (sub, rel, obj, time).
    Returns (predictions (B, N_ent), [(lhs, rel, objs)], te_w) like the module.
    """
    B = x.shape[0]
    N = ent_w.shape[0]

    sub, rela, obj, time = x[:, 0], x[:, 1], x[:, 2], x[:, 3]

    # ---- glue: gathers + tiny O(B*R) / O(B*R^2) prep (hoisted out of grid) ----
    time_eb = jnp.take(te_w, time, axis=0)                              # (B, R)
    lhs = jnp.take(ent_w, sub, axis=0) * jnp.sin(
        jnp.take(W_w, sub, axis=0) * time_eb + jnp.take(b_w, sub, axis=0))
    objs = jnp.take(ent_w, obj, axis=0) * jnp.sin(
        jnp.take(W_w, obj, axis=0) * time_eb + jnp.take(b_w, obj, axis=0))
    rel = jnp.take(rel_w, rela, axis=0).reshape(B, rank, rank)          # (B, R, R)
    tmp = jnp.einsum('br,brk->bk', lhs, rel)                            # (B, R)

    # ---- layout: entities on the lane axis, padded to a multiple of the tile ----
    tn_eff = min(tn, _round_up(N, 128))
    n_pad = _round_up(N, tn_eff)
    pad = n_pad - N

    def prep(t):                       # (N, R) -> (R, N_pad), zero padded
        if pad:
            t = jnp.pad(t, ((0, pad), (0, 0)))
        return t.T

    ent_t, w_t, b_t = prep(ent_w), prep(W_w), prep(b_w)

    tmp3 = tmp[:, None, :]             # (B, 1, R)  MXU lhs row per query
    te3 = time_eb[:, :, None]          # (B, R, 1)  broadcast column per query

    if buffers is None:
        ent_spec = pl.BlockSpec((rank, tn_eff), lambda j: (0, j))
    else:                              # deeper input pipelining (v5e knob)
        ent_spec = pl.BlockSpec((rank, tn_eff), lambda j: (0, j),
                                pipeline_mode=pl.Buffered(buffers))

    # Per-step VMEM: 2 bufs * 3 tables * rank*tn*4B (+ small vecs/out) — far
    # under the default scoped VMEM limit even at tn=4096, rank=32.
    preds3 = pl.pallas_call(
        trescal_scores_kernel,
        out_shape=jax.ShapeDtypeStruct((B, 1, n_pad), jnp.float32),
        grid_spec=pltpu.PrefetchScalarGridSpec(
            num_scalar_prefetch=0,
            grid=(n_pad // tn_eff,),
            in_specs=[pl.BlockSpec((B, 1, rank), lambda j: (0, 0, 0)),
                      pl.BlockSpec((B, rank, 1), lambda j: (0, 0, 0)),
                      ent_spec, ent_spec, ent_spec],
            out_specs=pl.BlockSpec((B, 1, tn_eff), lambda j: (0, 0, j))),
        compiler_params=pltpu.CompilerParams(
            dimension_semantics=("parallel",)),
    )(tmp3, te3, ent_t, w_t, b_t)

    preds = preds3[:, 0, :N]
    return preds, [(lhs, rel, objs)], te_w


def trescal_reference(x, ent_w, rel_w, te_w, W_w, b_w, rank):
    """Pure-JAX transcription of the PyTorch forward (for validation)."""
    sub, rela, obj, time = x[:, 0], x[:, 1], x[:, 2], x[:, 3]
    time_eb = te_w[time]
    lhs = ent_w[sub] * jnp.sin(W_w[sub] * time_eb + b_w[sub])
    rel = rel_w[rela].reshape(-1, rank, rank)
    objs = ent_w[obj] * jnp.sin(W_w[obj] * time_eb + b_w[obj])
    rhs = ent_w[None, :, :] * jnp.sin(
        W_w[None, :, :] * time_eb[:, None, :] + b_w[None, :, :])
    preds = jnp.einsum('br,brk,bek->be', lhs, rel, rhs)
    return preds, lhs, objs


def xavier_uniform(key, shape):
    fan_out, fan_in = shape[0], shape[1]     # torch convention for 2-D weights
    bound = float(np.sqrt(6.0 / (fan_in + fan_out)))
    return jax.random.uniform(key, shape, jnp.float32, minval=-bound, maxval=bound)


if __name__ == "__main__":
    # sizes = (n_entities, n_relations, n_entities, n_timestamps)
    # N_ENT deliberately NOT a multiple of 128 to exercise the padding path.
    N_ENT, N_REL, N_TIME = 200, 6, 16
    RANK = 32
    B = 8

    key = jax.random.PRNGKey(0)
    k_ent, k_rel, k_te, k_w, k_b, k_s, k_r, k_o, k_t = jax.random.split(key, 9)

    ent_w = xavier_uniform(k_ent, (N_ENT, RANK))         # embeddings[0] (= lhs = rhs)
    rel_w = xavier_uniform(k_rel, (N_REL, RANK * RANK))  # embeddings[1]
    te_w = xavier_uniform(k_te, (N_TIME, RANK))          # te
    W_w = xavier_uniform(k_w, (N_ENT, RANK))             # W
    b_w = xavier_uniform(k_b, (N_ENT, RANK))             # b

    x = jnp.stack([
        jax.random.randint(k_s, (B,), 0, N_ENT),
        jax.random.randint(k_r, (B,), 0, N_REL),
        jax.random.randint(k_o, (B,), 0, N_ENT),
        jax.random.randint(k_t, (B,), 0, N_TIME),
    ], axis=1).astype(jnp.int32)

    fwd = jax.jit(trescal_forward, static_argnames=("rank", "tn", "buffers"))

    ref_preds, ref_lhs, ref_objs = trescal_reference(
        x, ent_w, rel_w, te_w, W_w, b_w, RANK)

    # Large-tile config (clamped to the padded entity count) and a small-tile
    # config (multi-step grid) to exercise both grid paths.
    for tile in (1024, 128):
        preds, ((lhs, rel, objs),), te_out = fwd(
            x, ent_w, rel_w, te_w, W_w, b_w, rank=RANK, tn=tile)
        jax.block_until_ready(preds)

        np.testing.assert_allclose(np.asarray(preds), np.asarray(ref_preds),
                                   rtol=1e-4, atol=1e-5)
        np.testing.assert_allclose(np.asarray(lhs), np.asarray(ref_lhs),
                                   rtol=1e-5, atol=1e-5)
        np.testing.assert_allclose(np.asarray(objs), np.asarray(ref_objs),
                                   rtol=1e-5, atol=1e-5)

    print("KERNEL_OK")
</pallas_src>

<mosaic_0001>
module attributes {stable_mosaic.version = 11 : i64} {
  func.func @trescal_scores_kernel(%arg0: i32, %arg1: memref<8x1x32xf32, #tpu.memory_space<vmem>>, %arg2: memref<8x32x1xf32, #tpu.memory_space<vmem>>, %arg3: memref<32x256xf32, #tpu.memory_space<vmem>>, %arg4: memref<32x256xf32, #tpu.memory_space<vmem>>, %arg5: memref<32x256xf32, #tpu.memory_space<vmem>>, %arg6: memref<8x1x256xf32, #tpu.memory_space<vmem>>) attributes {dimension_semantics = [#tpu.dimension_semantics<parallel>], iteration_bounds = array<i64: 1>, scalar_prefetch = 0 : i64, scratch_operands = 0 : i64, tpu.core_type = #tpu.core_type<tc>, window_params = [{pipeline_mode = #tpu.pipeline_mode<synchronous>, transform_indices = @transform_0, window_bounds = array<i64: 8, 1, 32>}, {pipeline_mode = #tpu.pipeline_mode<synchronous>, transform_indices = @transform_1, window_bounds = array<i64: 8, 32, 1>}, {transform_indices = @transform_2, window_bounds = array<i64: 32, 256>}, {transform_indices = @transform_3, window_bounds = array<i64: 32, 256>}, {transform_indices = @transform_4, window_bounds = array<i64: 32, 256>}, {transform_indices = @transform_5, window_bounds = array<i64: 8, 1, 256>}]} {
    %c0_i32 = arith.constant 0 : i32
    %c8_i32 = arith.constant 8 : i32
    %0 = arith.addi %c0_i32, %c8_i32 : i32
    %c1_i32 = arith.constant 1 : i32
    scf.for %arg7 = %c0_i32 to %0 step %c1_i32  : i32 {
      %1 = arith.index_cast %arg7 : i32 to index
      %c0 = arith.constant 0 : index
      %c0_1 = arith.constant 0 : index
      %2 = vector.load %arg2[%1, %c0, %c0_1] : memref<8x32x1xf32, #tpu.memory_space<vmem>>, vector<1x32x1xf32>
      %3 = vector.shape_cast %2 : vector<1x32x1xf32> to vector<32x1xf32>
      %c0_2 = arith.constant 0 : index
      %c0_3 = arith.constant 0 : index
      %4 = vector.load %arg3[%c0_2, %c0_3] : memref<32x256xf32, #tpu.memory_space<vmem>>, vector<32x256xf32>
      %c0_4 = arith.constant 0 : index
      %c0_5 = arith.constant 0 : index
      %5 = vector.load %arg4[%c0_4, %c0_5] : memref<32x256xf32, #tpu.memory_space<vmem>>, vector<32x256xf32>
      %6 = vector.broadcast %3 : vector<32x1xf32> to vector<32x256xf32>
      %7 = arith.mulf %5, %6 : vector<32x256xf32>
      %c0_6 = arith.constant 0 : index
      %c0_7 = arith.constant 0 : index
      %8 = vector.load %arg5[%c0_6, %c0_7] : memref<32x256xf32, #tpu.memory_space<vmem>>, vector<32x256xf32>
      %9 = arith.addf %7, %8 : vector<32x256xf32>
      %10 = math.sin %9 : vector<32x256xf32>
      %11 = arith.mulf %4, %10 : vector<32x256xf32>
      %12 = arith.index_cast %arg7 : i32 to index
      %c0_8 = arith.constant 0 : index
      %c0_9 = arith.constant 0 : index
      %13 = vector.load %arg1[%12, %c0_8, %c0_9] : memref<8x1x32xf32, #tpu.memory_space<vmem>>, vector<1x1x32xf32>
      %14 = vector.shape_cast %13 : vector<1x1x32xf32> to vector<1x32xf32>
      %cst = arith.constant dense<0.000000e+00> : vector<1x256xf32>
      %15 = tpu.matmul %14, %11, %cst {dimension_numbers = #tpu.dot_dimension_numbers<[1], [0], [0], [1], [0, 0, 1, 1], [], []>} : vector<1x32xf32>, vector<32x256xf32>, vector<1x256xf32> -> vector<1x256xf32>
      %16 = arith.index_cast %arg7 : i32 to index
      %c0_10 = arith.constant 0 : index
      %c0_11 = arith.constant 0 : index
      %17 = vector.load %arg6[%16, %c0_10, %c0_11] : memref<8x1x256xf32, #tpu.memory_space<vmem>>, vector<1x1x256xf32>
      %18 = vector.shape_cast %17 : vector<1x1x256xf32> to vector<1x256xf32>
      %19 = vector.shape_cast %15 : vector<1x256xf32> to vector<1x1x256xf32>
      tpu.vector_store %arg6[%16, %c0_10, %c0_11], %19 {strides = array<i32>} : memref<8x1x256xf32, #tpu.memory_space<vmem>>, vector<1x1x256xf32>,
    }
    %c8_i32_0 = arith.constant 8 : i32
    return
  }
  func.func @transform_0(%arg0: i32) -> (i32, i32, i32) {
    %c0_i32 = arith.constant 0 : i32
    %c0_i32_0 = arith.constant 0 : i32
    %c0_i32_1 = arith.constant 0 : i32
    %c0_i32_2 = arith.constant 0 : i32
    return %c0_i32, %c0_i32_0, %c0_i32_1 : i32, i32, i32
  }
  func.func @transform_1(%arg0: i32) -> (i32, i32, i32) {
    %c0_i32 = arith.constant 0 : i32
    %c0_i32_0 = arith.constant 0 : i32
    %c0_i32_1 = arith.constant 0 : i32
    %c0_i32_2 = arith.constant 0 : i32
    return %c0_i32, %c0_i32_0, %c0_i32_1 : i32, i32, i32
  }
  func.func @transform_2(%arg0: i32) -> (i32, i32) {
    %c0_i32 = arith.constant 0 : i32
    %c0_i32_0 = arith.constant 0 : i32
    return %c0_i32, %arg0 : i32, i32
  }
  func.func @transform_3(%arg0: i32) -> (i32, i32) {
    %c0_i32 = arith.constant 0 : i32
    %c0_i32_0 = arith.constant 0 : i32
    return %c0_i32, %arg0 : i32, i32
  }
  func.func @transform_4(%arg0: i32) -> (i32, i32) {
    %c0_i32 = arith.constant 0 : i32
    %c0_i32_0 = arith.constant 0 : i32
    return %c0_i32, %arg0 : i32, i32
  }
  func.func @transform_5(%arg0: i32) -> (i32, i32, i32) {
    %c0_i32 = arith.constant 0 : i32
    %c0_i32_0 = arith.constant 0 : i32
    %c0_i32_1 = arith.constant 0 : i32
    return %c0_i32, %c0_i32_0, %arg0 : i32, i32, i32
  }
}

</mosaic_0001>

<llo_original>
// kernel: trescal_forward.1
$region0: #{trescal_forward.1}
  #allocation0 [shape = 'u32[]', space=smem, size = 0x4, offset = 0x4, fixed_abs, tag = 'smem constant byte address 0x4 - core index']
  #allocation1 [shape = 'u32[144,128]{1,0:T(1,128)}', space=vmem, size = 0x12000, scoped, tag = 'internal scratch']
  %s0 = inlined_call_operand.vmem [shape: f32[8,1,32], index: 0, kind: input, shape index: {}]
  %s1 = inlined_call_operand.vmem [shape: f32[8,32,1], index: 1, kind: input, shape index: {}]
  %s2 = inlined_call_operand.vmem [shape: f32[32,256], index: 2, kind: input, shape index: {}]
  %s3 = inlined_call_operand.vmem [shape: f32[32,256], index: 3, kind: input, shape index: {}]
  %s4 = inlined_call_operand.vmem [shape: f32[32,256], index: 4, kind: input, shape index: {}]
  %s5 = inlined_call_operand.vmem [shape: f32[8,1,256], index: 5, kind: output, shape index: {}]
  %s6 = sld [smem:[#allocation0]]
  $region37: #{trescal_forward.1} parent=0
    _
  %s8 = ssub.s32 1, %s6
  %s9 = scalar_select 0, %s8, %s6
  // Predicated region
  $region2: #{trescal_forward.1} parent=0 // pred_check
    _
  $region3: #{trescal_forward.1} parent=0 // pred_check_branch
    %11 = sbr.rel (0) target = $region5
  $region4: #{trescal_forward.1} parent=0 // pred_region
    _
  $region5: #{trescal_forward.1} parent=0 // pred_fallthru
    _
  // Predicated region
  $region6: #{trescal_forward.1} parent=0 // pred_check
    _
  $region7: #{trescal_forward.1} parent=0 // pred_check_branch
    %13 = sbr.rel (0) target = $region9
  $region8: #{trescal_forward.1} parent=0 // pred_region
    _
  $region9: #{trescal_forward.1} parent=0 // pred_fallthru
    _
  // Predicated region
  $region10: #{trescal_forward.1} parent=0 // pred_check
    _
  $region11: #{trescal_forward.1} parent=0 // pred_check_branch
    %15 = sbr.rel (0) target = $region13
  $region12: #{trescal_forward.1} parent=0 // pred_region
    _
  $region13: #{trescal_forward.1} parent=0 // pred_fallthru
    _
  // Predicated region
  $region14: #{trescal_forward.1} parent=0 // pred_check
    _
  $region15: #{trescal_forward.1} parent=0 // pred_check_branch
    %17 = sbr.rel (0) target = $region17
  $region16: #{trescal_forward.1} parent=0 // pred_region
    _
  $region17: #{trescal_forward.1} parent=0 // pred_fallthru
    _
  // Predicated region
  $region18: #{trescal_forward.1} parent=0 // pred_check
    _
  $region19: #{trescal_forward.1} parent=0 // pred_check_branch
    %19 = sbr.rel (0) target = $region21
  $region20: #{trescal_forward.1} parent=0 // pred_region
    _
  $region21: #{trescal_forward.1} parent=0 // pred_fallthru
    _
  loop: start=0, step=1, limit=8
  $region22: #{trescal_forward.1} parent=0 // loop_pre_header
    _
  $region23: #{trescal_forward.1} parent=0 // loop_header
    %s21 = sphi 0, %s25
    %p22 = scmp.ge.s32.totalorder %s21, 8
  $region24: #{trescal_forward.1} parent=0 // loop_header_branch
    %24 = sbr.rel (%p22) target = $region28
  $region25: #{trescal_forward.1} parent=0 // loop_body
    %s26 = smul.u32 %s21, 32
    %s27 = scalar_lea.vmem %s1, %s26
    %v28 = vld [vmem:[%s27] sm:$0xff]
    %v29 = vld [vmem:[%s27 + $0x8] sm:$0xff]
    %v30 = vld [vmem:[%s27 + $0x10] sm:$0xff]
    %v31 = vld [vmem:[%s27 + $0x18] sm:$0xff]
    %v32 = vld [vmem:[%s2] sm:$0xff]
    %v33 = vld [vmem:[%s2 + $0x8] sm:$0xff]
    %v34 = vld [vmem:[%s2 + $0x10] sm:$0xff]
    %v35 = vld [vmem:[%s2 + $0x18] sm:$0xff]
    %v36 = vld [vmem:[%s2 + $0x20] sm:$0xff]
    %v37 = vld [vmem:[%s2 + $0x28] sm:$0xff]
    %v38 = vld [vmem:[%s2 + $0x30] sm:$0xff]
    %v39 = vld [vmem:[%s2 + $0x38] sm:$0xff]
    %v40 = vld [vmem:[%s3] sm:$0xff]
    %v41 = vld [vmem:[%s3 + $0x8] sm:$0xff]
    %v42 = vld [vmem:[%s3 + $0x10] sm:$0xff]
    %v43 = vld [vmem:[%s3 + $0x18] sm:$0xff]
    %v44 = vld [vmem:[%s3 + $0x20] sm:$0xff]
    %v45 = vld [vmem:[%s3 + $0x28] sm:$0xff]
    %v46 = vld [vmem:[%s3 + $0x30] sm:$0xff]
    %v47 = vld [vmem:[%s3 + $0x38] sm:$0xff]
    %49 = vset.pattern.permute.xlu0 0
    %50 = vperm.xlu0 %49, %v28
    %v51 = vpop.permute.xlu0 %50
    %54 = vset.pattern.permute.xlu0 0
    %55 = vperm.xlu0 %54, %v29
    %v56 = vpop.permute.xlu0 %55
    %59 = vset.pattern.permute.xlu0 0
    %60 = vperm.xlu0 %59, %v30
    %v61 = vpop.permute.xlu0 %60
    %64 = vset.pattern.permute.xlu0 0
    %65 = vperm.xlu0 %64, %v31
    %v66 = vpop.permute.xlu0 %65
    %v68 = vmul.f32 %v40, %v51
    %v69 = vmul.f32 %v41, %v51
    %v70 = vmul.f32 %v42, %v56
    %v71 = vmul.f32 %v43, %v56
    %v72 = vmul.f32 %v44, %v61
    %v73 = vmul.f32 %v45, %v61
    %v74 = vmul.f32 %v46, %v66
    %v75 = vmul.f32 %v47, %v66
    %v76 = vld [vmem:[%s4] sm:$0xff]
    %v77 = vld [vmem:[%s4 + $0x8] sm:$0xff]
    %v78 = vld [vmem:[%s4 + $0x10] sm:$0xff]
    %v79 = vld [vmem:[%s4 + $0x18] sm:$0xff]
    %v80 = vld [vmem:[%s4 + $0x20] sm:$0xff]
    %v81 = vld [vmem:[%s4 + $0x28] sm:$0xff]
    %v82 = vld [vmem:[%s4 + $0x30] sm:$0xff]
    %v83 = vld [vmem:[%s4 + $0x38] sm:$0xff]
    %v84 = vadd.f32 %v68, %v76
    %v85 = vadd.f32 %v69, %v77
    %v86 = vadd.f32 %v70, %v78
    %v87 = vadd.f32 %v71, %v79
    %v88 = vadd.f32 %v72, %v80
    %v89 = vadd.f32 %v73, %v81
    %v90 = vadd.f32 %v74, %v82
    %v91 = vadd.f32 %v75, %v83
    %v92 = vand.u32 2147483647, %v84
    %vm93 = vcmp.le.f32.partialorder %v92, 0.7853982
    %vm94 = vcmp.lt.s32.totalorder %v84, 0
    %v95 = vand.u32 %v84, 2139095040
    %v96 = vshrl.u32 %v95, 23
    %v97 = vsub.s32 %v96, 127
    %v98 = vand.u32 2147483647, %v84
    %v99 = vand.u32 %v98, 8388607
    %v100 = vor.u32 %v99, 8388608
    %v101 = vsub.s32 0, %v100
    %v102 = vadd.s32 %v97, 1
    %vm103 = vcmp.gt.s32.totalorder %v102, 0
    %v104 = vsel %vm103, %v102, 0
    %v105 = vshrl.u32 %v104, 5
    %v106 = vand.u32 %v104, 31
    %v107 = vsub.s32 32, %v106
    %v108 = vshrl.u32 683565275, %v107
    %v109 = vshll.u32 683565275, %v106
    %v110 = vshrl.u32 2475754826, %v107
    %v111 = vor.u32 %v109, %v110
    %v112 = vshll.u32 2475754826, %v106
    %v113 = vshrl.u32 2131351028, %v107
    %v114 = vor.u32 %v112, %v113
    %v115 = vshll.u32 2131351028, %v106
    %v116 = vshrl.u32 2102212464, %v107
    %v117 = vor.u32 %v115, %v116
    %v118 = vshll.u32 2102212464, %v106
    %v119 = vshrl.u32 920167782, %v107
    %v120 = vor.u32 %v118, %v119
    %v121 = vshll.u32 920167782, %v106
    %v122 = vshrl.u32 1326507024, %v107
    %v123 = vor.u32 %v121, %v122
    %vm124 = vcmp.lt.s32.totalorder %v105, 1
    %vm125 = vcmp.lt.s32.totalorder %v105, 2
    %vm126 = vcmp.lt.s32.totalorder %v105, 3
    %vm127 = vcmp.lt.s32.totalorder %v105, 4
    %v128 = vsel %vm124, %v108, %v111
    %v129 = vsel %vm127, %v117, 2102212464
    %v130 = vsel %vm126, %v114, %v129
    %v131 = vsel %vm125, %v128, %v130
    %v132 = vsel %vm124, %v111, %v114
    %v133 = vsel %vm127, %v120, 920167782
    %v134 = vsel %vm126, %v117, %v133
    %v135 = vsel %vm125, %v132, %v134
    %v136 = vsel %vm124, %v114, %v117
    %v137 = vsel %vm127, %v123, 1326507024
    %v138 = vsel %vm126, %v120, %v137
    %v139 = vsel %vm125, %v136, %v138
    %v140 = vshll.u32 %v100, 8
    %v141 = vmul.u32.u64.compose %v140, %v139
    %v142 = vextract.low.u32 %v141
    %v143 = vextract.high.u32 %v141
    %v144 = vmul.u32.u64.compose %v140, %v135
    %v145 = vextract.low.u32 %v144
    %v146 = vextract.high.u32 %v144
    %v147 = vmul.u32 %v140, %v131
    %v148 = vadd.s32 %v143, %v145
    %vm149 = vc.u32 %v143, %v145
    %v150 = vadd.s32 %v146, 1
    %v151 = vsel %vm149, %v150, %v146
    %v152 = vadd.s32 %v147, %v151
    %v153 = vadd.s32 %v152, 536870912
    %v154 = vshrl.u32 %v153, 30
    %v155 = vshll.u32 %v154, 30
    %v156 = vsub.s32 %v152, %v155
    %vm157 = vcmp.lt.s32.totalorder %v156, 0
    %v158 = vsub.s32 0, %v156
    %v159 = vsel %vm157, %v158, %v156
    %v160 = vclz %v159
    %v161 = vsub.s32 %v160, 2
    %vm162 = vcmp.gt.s32.totalorder 0, %v161
    %v163 = vsel %vm162, 0, %v161
    %v164 = vsub.s32 32, %v163
    %v165 = vshll.u32 %v156, %v163
    %v166 = vshrl.u32 %v148, %v164
    %v167 = vor.u32 %v165, %v166
    %v168 = vsub.s32 4294967266, %v163
    %v169 = vadd.s32 %v168, 127
    %v170 = vshll.u32 %v169, 23
    %v171 = vor.u32 4788187, %v170
    %v172 = vand.u32 2147483647, %v171
    %v174 = vcvt.s32.f32 %v167
    %v175 = vmul.f32 %v174, %v172
    %v176 = vxor.u32 %v175, 2147483648
    %v177 = vsel %vm94, %v176, %v175
    %v178 = vsub.s32 4, %v154
    %v179 = vsel %vm94, %v178, %v154
    %v180 = vsel %vm93, %v84, %v177
    %v181 = vsel %vm93, 0, %v179
    %v182 = vcosq.f32.pop %v180
    %v183 = vsinq.f32.pop %v180
    %vm184 = vweird.f32 %v84
    %v185 = vadd.s32 %v181, 3
    %v186 = vand.u32 %v185, 3
    %vm187 = vcmp.lt.s32.totalorder %v186, 2
    %vm188 = vcmp.eq.s32.totalorder %v186, 0
    %v189 = vxor.u32 %v183, 2147483648
    %v190 = vsel %vm188, %v182, %v189
    %vm191 = vcmp.eq.s32.totalorder %v186, 2
    %v192 = vxor.u32 %v182, 2147483648
    %v193 = vsel %vm191, %v192, %v183
    %v194 = vsel %vm187, %v190, %v193
    %v195 = vsel %vm184, nan, %v194
    %v196 = vand.u32 2147483647, %v85
    %vm197 = vcmp.le.f32.partialorder %v196, 0.7853982
    %vm198 = vcmp.lt.s32.totalorder %v85, 0
    %v199 = vand.u32 %v85, 2139095040
    %v200 = vshrl.u32 %v199, 23
    %v201 = vsub.s32 %v200, 127
    %v202 = vand.u32 2147483647, %v85
    %v203 = vand.u32 %v202, 8388607
    %v204 = vor.u32 %v203, 8388608
    %v205 = vsub.s32 0, %v204
    %v206 = vadd.s32 %v201, 1
    %vm207 = vcmp.gt.s32.totalorder %v206, 0
    %v208 = vsel %vm207, %v206, 0
    %v209 = vshrl.u32 %v208, 5
    %v210 = vand.u32 %v208, 31
    %v211 = vsub.s32 32, %v210
    %v212 = vshrl.u32 683565275, %v211
    %v213 = vshll.u32 683565275, %v210
    %v214 = vshrl.u32 2475754826, %v211
    %v215 = vor.u32 %v213, %v214
    %v216 = vshll.u32 2475754826, %v210
    %v217 = vshrl.u32 2131351028, %v211
    %v218 = vor.u32 %v216, %v217
    %v219 = vshll.u32 2131351028, %v210
    %v220 = vshrl.u32 2102212464, %v211
    %v221 = vor.u32 %v219, %v220
    %v222 = vshll.u32 2102212464, %v210
    %v223 = vshrl.u32 920167782, %v211
    %v224 = vor.u32 %v222, %v223
    %v225 = vshll.u32 920167782, %v210
    %v226 = vshrl.u32 1326507024, %v211
    %v227 = vor.u32 %v225, %v226
    %vm228 = vcmp.lt.s32.totalorder %v209, 1
    %vm229 = vcmp.lt.s32.totalorder %v209, 2
    %vm230 = vcmp.lt.s32.totalorder %v209, 3
    %vm231 = vcmp.lt.s32.totalorder %v209, 4
    %v232 = vsel %vm228, %v212, %v215
    %v233 = vsel %vm231, %v221, 2102212464
    %v234 = vsel %vm230, %v218, %v233
    %v235 = vsel %vm229, %v232, %v234
    %v236 = vsel %vm228, %v215, %v218
    %v237 = vsel %vm231, %v224, 920167782
    %v238 = vsel %vm230, %v221, %v237
    %v239 = vsel %vm229, %v236, %v238
    %v240 = vsel %vm228, %v218, %v221
    %v241 = vsel %vm231, %v227, 1326507024
    %v242 = vsel %vm230, %v224, %v241
    %v243 = vsel %vm229, %v240, %v242
    %v244 = vshll.u32 %v204, 8
    %v245 = vmul.u32.u64.compose %v244, %v243
    %v246 = vextract.low.u32 %v245
    %v247 = vextract.high.u32 %v245
    %v248 = vmul.u32.u64.compose %v244, %v239
    %v249 = vextract.low.u32 %v248
    %v250 = vextract.high.u32 %v248
    %v251 = vmul.u32 %v244, %v235
    %v252 = vadd.s32 %v247, %v249
    %vm253 = vc.u32 %v247, %v249
    %v254 = vadd.s32 %v250, 1
    %v255 = vsel %vm253, %v254, %v250
    %v256 = vadd.s32 %v251, %v255
    %v257 = vadd.s32 %v256, 536870912
    %v258 = vshrl.u32 %v257, 30
    %v259 = vshll.u32 %v258, 30
    %v260 = vsub.s32 %v256, %v259
    %vm261 = vcmp.lt.s32.totalorder %v260, 0
    %v262 = vsub.s32 0, %v260
    %v263 = vsel %vm261, %v262, %v260
    %v264 = vclz %v263
    %v265 = vsub.s32 %v264, 2
    %vm266 = vcmp.gt.s32.totalorder 0, %v265
    %v267 = vsel %vm266, 0, %v265
    %v268 = vsub.s32 32, %v267
    %v269 = vshll.u32 %v260, %v267
    %v270 = vshrl.u32 %v252, %v268
    %v271 = vor.u32 %v269, %v270
    %v272 = vsub.s32 4294967266, %v267
    %v273 = vadd.s32 %v272, 127
    %v274 = vshll.u32 %v273, 23
    %v275 = vor.u32 4788187, %v274
    %v276 = vand.u32 2147483647, %v275
    %v278 = vcvt.s32.f32 %v271
    %v279 = vmul.f32 %v278, %v276
    %v280 = vxor.u32 %v279, 2147483648
    %v281 = vsel %vm198, %v280, %v279
    %v282 = vsub.s32 4, %v258
    %v283 = vsel %vm198, %v282, %v258
    %v284 = vsel %vm197, %v85, %v281
    %v285 = vsel %vm197, 0, %v283
    %v286 = vcosq.f32.pop %v284
    %v287 = vsinq.f32.pop %v284
    %vm288 = vweird.f32 %v85
    %v289 = vadd.s32 %v285, 3
    %v290 = vand.u32 %v289, 3
    %vm291 = vcmp.lt.s32.totalorder %v290, 2
    %vm292 = vcmp.eq.s32.totalorder %v290, 0
    %v293 = vxor.u32 %v287, 2147483648
    %v294 = vsel %vm292, %v286, %v293
    %vm295 = vcmp.eq.s32.totalorder %v290, 2
    %v296 = vxor.u32 %v286, 2147483648
    %v297 = vsel %vm295, %v296, %v287
    %v298 = vsel %vm291, %v294, %v297
    %v299 = vsel %vm288, nan, %v298
    %v300 = vand.u32 2147483647, %v86
    %vm301 = vcmp.le.f32.partialorder %v300, 0.7853982
    %vm302 = vcmp.lt.s32.totalorder %v86, 0
    %v303 = vand.u32 %v86, 2139095040
    %v304 = vshrl.u32 %v303, 23
    %v305 = vsub.s32 %v304, 127
    %v306 = vand.u32 2147483647, %v86
    %v307 = vand.u32 %v306, 8388607
    %v308 = vor.u32 %v307, 8388608
    %v309 = vsub.s32 0, %v308
    %v310 = vadd.s32 %v305, 1
    %vm311 = vcmp.gt.s32.totalorder %v310, 0
    %v312 = vsel %vm311, %v310, 0
    %v313 = vshrl.u32 %v312, 5
    %v314 = vand.u32 %v312, 31
    %v315 = vsub.s32 32, %v314
    %v316 = vshrl.u32 683565275, %v315
    %v317 = vshll.u32 683565275, %v314
    %v318 = vshrl.u32 2475754826, %v315
    %v319 = vor.u32 %v317, %v318
    %v320 = vshll.u32 2475754826, %v314
    %v321 = vshrl.u32 2131351028, %v315
    %v322 = vor.u32 %v320, %v321
    %v323 = vshll.u32 2131351028, %v314
    %v324 = vshrl.u32 2102212464, %v315
    %v325 = vor.u32 %v323, %v324
    %v326 = vshll.u32 2102212464, %v314
    %v327 = vshrl.u32 920167782, %v315
    %v328 = vor.u32 %v326, %v327
    %v329 = vshll.u32 920167782, %v314
    %v330 = vshrl.u32 1326507024, %v315
    %v331 = vor.u32 %v329, %v330
    %vm332 = vcmp.lt.s32.totalorder %v313, 1
    %vm333 = vcmp.lt.s32.totalorder %v313, 2
    %vm334 = vcmp.lt.s32.totalorder %v313, 3
    %vm335 = vcmp.lt.s32.totalorder %v313, 4
    %v336 = vsel %vm332, %v316, %v319
    %v337 = vsel %vm335, %v325, 2102212464
    %v338 = vsel %vm334, %v322, %v337
    %v339 = vsel %vm333, %v336, %v338
    %v340 = vsel %vm332, %v319, %v322
    %v341 = vsel %vm335, %v328, 920167782
    %v342 = vsel %vm334, %v325, %v341
    %v343 = vsel %vm333, %v340, %v342
    %v344 = vsel %vm332, %v322, %v325
    %v345 = vsel %vm335, %v331, 1326507024
    %v346 = vsel %vm334, %v328, %v345
    %v347 = vsel %vm333, %v344, %v346
    %v348 = vshll.u32 %v308, 8
    %v349 = vmul.u32.u64.compose %v348, %v347
    %v350 = vextract.low.u32 %v349
    %v351 = vextract.high.u32 %v349
    %v352 = vmul.u32.u64.compose %v348, %v343
    %v353 = vextract.low.u32 %v352
    %v354 = vextract.high.u32 %v352
    %v355 = vmul.u32 %v348, %v339
    %v356 = vadd.s32 %v351, %v353
    %vm357 = vc.u32 %v351, %v353
    %v358 = vadd.s32 %v354, 1
    %v359 = vsel %vm357, %v358, %v354
    %v360 = vadd.s32 %v355, %v359
    %v361 = vadd.s32 %v360, 536870912
    %v362 = vshrl.u32 %v361, 30
    %v363 = vshll.u32 %v362, 30
    %v364 = vsub.s32 %v360, %v363
    %vm365 = vcmp.lt.s32.totalorder %v364, 0
    %v366 = vsub.s32 0, %v364
    %v367 = vsel %vm365, %v366, %v364
    %v368 = vclz %v367
    %v369 = vsub.s32 %v368, 2
    %vm370 = vcmp.gt.s32.totalorder 0, %v369
    %v371 = vsel %vm370, 0, %v369
    %v372 = vsub.s32 32, %v371
    %v373 = vshll.u32 %v364, %v371
    %v374 = vshrl.u32 %v356, %v372
    %v375 = vor.u32 %v373, %v374
    %v376 = vsub.s32 4294967266, %v371
    %v377 = vadd.s32 %v376, 127
    %v378 = vshll.u32 %v377, 23
    %v379 = vor.u32 4788187, %v378
    %v380 = vand.u32 2147483647, %v379
    %v382 = vcvt.s32.f32 %v375
    %v383 = vmul.f32 %v382, %v380
    %v384 = vxor.u32 %v383, 2147483648
    %v385 = vsel %vm302, %v384, %v383
    %v386 = vsub.s32 4, %v362
    %v387 = vsel %vm302, %v386, %v362
    %v388 = vsel %vm301, %v86, %v385
    %v389 = vsel %vm301, 0, %v387
    %v390 = vcosq.f32.pop %v388
    %v391 = vsinq.f32.pop %v388
    %vm392 = vweird.f32 %v86
    %v393 = vadd.s32 %v389, 3
    %v394 = vand.u32 %v393, 3
    %vm395 = vcmp.lt.s32.totalorder %v394, 2
    %vm396 = vcmp.eq.s32.totalorder %v394, 0
    %v397 = vxor.u32 %v391, 2147483648
    %v398 = vsel %vm396, %v390, %v397
    %vm399 = vcmp.eq.s32.totalorder %v394, 2
    %v400 = vxor.u32 %v390, 2147483648
    %v401 = vsel %vm399, %v400, %v391
    %v402 = vsel %vm395, %v398, %v401
    %v403 = vsel %vm392, nan, %v402
    %v404 = vand.u32 2147483647, %v87
    %vm405 = vcmp.le.f32.partialorder %v404, 0.7853982
    %vm406 = vcmp.lt.s32.totalorder %v87, 0
    %v407 = vand.u32 %v87, 2139095040
    %v408 = vshrl.u32 %v407, 23
    %v409 = vsub.s32 %v408, 127
    %v410 = vand.u32 2147483647, %v87
    %v411 = vand.u32 %v410, 8388607
    %v412 = vor.u32 %v411, 8388608
    %v413 = vsub.s32 0, %v412
    %v414 = vadd.s32 %v409, 1
    %vm415 = vcmp.gt.s32.totalorder %v414, 0
    %v416 = vsel %vm415, %v414, 0
    %v417 = vshrl.u32 %v416, 5
    %v418 = vand.u32 %v416, 31
    %v419 = vsub.s32 32, %v418
    %v420 = vshrl.u32 683565275, %v419
    %v421 = vshll.u32 683565275, %v418
    %v422 = vshrl.u32 2475754826, %v419
    %v423 = vor.u32 %v421, %v422
    %v424 = vshll.u32 2475754826, %v418
    %v425 = vshrl.u32 2131351028, %v419
    %v426 = vor.u32 %v424, %v425
    %v427 = vshll.u32 2131351028, %v418
    %v428 = vshrl.u32 2102212464, %v419
    %v429 = vor.u32 %v427, %v428
    %v430 = vshll.u32 2102212464, %v418
    %v431 = vshrl.u32 920167782, %v419
    %v432 = vor.u32 %v430, %v431
    %v433 = vshll.u32 920167782, %v418
    %v434 = vshrl.u32 1326507024, %v419
    %v435 = vor.u32 %v433, %v434
    %vm436 = vcmp.lt.s32.totalorder %v417, 1
    %vm437 = vcmp.lt.s32.totalorder %v417, 2
    %vm438 = vcmp.lt.s32.totalorder %v417, 3
    %vm439 = vcmp.lt.s32.totalorder %v417, 4
    %v440 = vsel %vm436, %v420, %v423
    %v441 = vsel %vm439, %v429, 2102212464
    %v442 = vsel %vm438, %v426, %v441
    %v443 = vsel %vm437, %v440, %v442
    %v444 = vsel %vm436, %v423, %v426
    %v445 = vsel %vm439, %v432, 920167782
    %v446 = vsel %vm438, %v429, %v445
    %v447 = vsel %vm437, %v444, %v446
    %v448 = vsel %vm436, %v426, %v429
    %v449 = vsel %vm439, %v435, 1326507024
    %v450 = vsel %vm438, %v432, %v449
    %v451 = vsel %vm437, %v448, %v450
    %v452 = vshll.u32 %v412, 8
    %v453 = vmul.u32.u64.compose %v452, %v451
    %v454 = vextract.low.u32 %v453
    %v455 = vextract.high.u32 %v453
    %v456 = vmul.u32.u64.compose %v452, %v447
    %v457 = vextract.low.u32 %v456
    %v458 = vextract.high.u32 %v456
    %v459 = vmul.u32 %v452, %v443
    %v460 = vadd.s32 %v455, %v457
    %vm461 = vc.u32 %v455, %v457
    %v462 = vadd.s32 %v458, 1
    %v463 = vsel %vm461, %v462, %v458
    %v464 = vadd.s32 %v459, %v463
    %v465 = vadd.s32 %v464, 536870912
    %v466 = vshrl.u32 %v465, 30
    %v467 = vshll.u32 %v466, 30
    %v468 = vsub.s32 %v464, %v467
    %vm469 = vcmp.lt.s32.totalorder %v468, 0
    %v470 = vsub.s32 0, %v468
    %v471 = vsel %vm469, %v470, %v468
    %v472 = vclz %v471
    %v473 = vsub.s32 %v472, 2
    %vm474 = vcmp.gt.s32.totalorder 0, %v473
    %v475 = vsel %vm474, 0, %v473
    %v476 = vsub.s32 32, %v475
    %v477 = vshll.u32 %v468, %v475
    %v478 = vshrl.u32 %v460, %v476
    %v479 = vor.u32 %v477, %v478
    %v480 = vsub.s32 4294967266, %v475
    %v481 = vadd.s32 %v480, 127
    %v482 = vshll.u32 %v481, 23
    %v483 = vor.u32 4788187, %v482
    %v484 = vand.u32 2147483647, %v483
    %v486 = vcvt.s32.f32 %v479
    %v487 = vmul.f32 %v486, %v484
    %v488 = vxor.u32 %v487, 2147483648
    %v489 = vsel %vm406, %v488, %v487
    %v490 = vsub.s32 4, %v466
    %v491 = vsel %vm406, %v490, %v466
    %v492 = vsel %vm405, %v87, %v489
    %v493 = vsel %vm405, 0, %v491
    %v494 = vcosq.f32.pop %v492
    %v495 = vsinq.f32.pop %v492
    %vm496 = vweird.f32 %v87
    %v497 = vadd.s32 %v493, 3
    %v498 = vand.u32 %v497, 3
    %vm499 = vcmp.lt.s32.totalorder %v498, 2
    %vm500 = vcmp.eq.s32.totalorder %v498, 0
    %v501 = vxor.u32 %v495, 2147483648
    %v502 = vsel %vm500, %v494, %v501
    %vm503 = vcmp.eq.s32.totalorder %v498, 2
    %v504 = vxor.u32 %v494, 2147483648
    %v505 = vsel %vm503, %v504, %v495
    %v506 = vsel %vm499, %v502, %v505
    %v507 = vsel %vm496, nan, %v506
    %v508 = vand.u32 2147483647, %v88
    %vm509 = vcmp.le.f32.partialorder %v508, 0.7853982
    %vm510 = vcmp.lt.s32.totalorder %v88, 0
    %v511 = vand.u32 %v88, 2139095040
    %v512 = vshrl.u32 %v511, 23
    %v513 = vsub.s32 %v512, 127
    %v514 = vand.u32 2147483647, %v88
    %v515 = vand.u32 %v514, 8388607
    %v516 = vor.u32 %v515, 8388608
    %v517 = vsub.s32 0, %v516
    %v518 = vadd.s32 %v513, 1
    %vm519 = vcmp.gt.s32.totalorder %v518, 0
    %v520 = vsel %vm519, %v518, 0
    %v521 = vshrl.u32 %v520, 5
    %v522 = vand.u32 %v520, 31
    %v523 = vsub.s32 32, %v522
    %v524 = vshrl.u32 683565275, %v523
    %v525 = vshll.u32 683565275, %v522
    %v526 = vshrl.u32 2475754826, %v523
    %v527 = vor.u32 %v525, %v526
    %v528 = vshll.u32 2475754826, %v522
    %v529 = vshrl.u32 2131351028, %v523
    %v530 = vor.u32 %v528, %v529
    %v531 = vshll.u32 2131351028, %v522
    %v532 = vshrl.u32 2102212464, %v523
    %v533 = vor.u32 %v531, %v532
    %v534 = vshll.u32 2102212464, %v522
    %v535 = vshrl.u32 920167782, %v523
    %v536 = vor.u32 %v534, %v535
    %v537 = vshll.u32 920167782, %v522
    %v538 = vshrl.u32 1326507024, %v523
    %v539 = vor.u32 %v537, %v538
    %vm540 = vcmp.lt.s32.totalorder %v521, 1
    %vm541 = vcmp.lt.s32.totalorder %v521, 2
    %vm542 = vcmp.lt.s32.totalorder %v521, 3
    %vm543 = vcmp.lt.s32.totalorder %v521, 4
    %v544 = vsel %vm540, %v524, %v527
    %v545 = vsel %vm543, %v533, 2102212464
    %v546 = vsel %vm542, %v530, %v545
    %v547 = vsel %vm541, %v544, %v546
    %v548 = vsel %vm540, %v527, %v530
    %v549 = vsel %vm543, %v536, 920167782
    %v550 = vsel %vm542, %v533, %v549
    %v551 = vsel %vm541, %v548, %v550
    %v552 = vsel %vm540, %v530, %v533
    %v553 = vsel %vm543, %v539, 1326507024
    %v554 = vsel %vm542, %v536, %v553
    %v555 = vsel %vm541, %v552, %v554
    %v556 = vshll.u32 %v516, 8
    %v557 = vmul.u32.u64.compose %v556, %v555
    %v558 = vextract.low.u32 %v557
    %v559 = vextract.high.u32 %v557
    %v560 = vmul.u32.u64.compose %v556, %v551
    %v561 = vextract.low.u32 %v560
    %v562 = vextract.high.u32 %v560
    %v563 = vmul.u32 %v556, %v547
    %v564 = vadd.s32 %v559, %v561
    %vm565 = vc.u32 %v559, %v561
    %v566 = vadd.s32 %v562, 1
    %v567 = vsel %vm565, %v566, %v562
    %v568 = vadd.s32 %v563, %v567
    %v569 = vadd.s32 %v568, 536870912
    %v570 = vshrl.u32 %v569, 30
    %v571 = vshll.u32 %v570, 30
    %v572 = vsub.s32 %v568, %v571
    %vm573 = vcmp.lt.s32.totalorder %v572, 0
    %v574 = vsub.s32 0, %v572
    %v575 = vsel %vm573, %v574, %v572
    %v576 = vclz %v575
    %v577 = vsub.s32 %v576, 2
    %vm578 = vcmp.gt.s32.totalorder 0, %v577
    %v579 = vsel %vm578, 0, %v577
    %v580 = vsub.s32 32, %v579
    %v581 = vshll.u32 %v572, %v579
    %v582 = vshrl.u32 %v564, %v580
    %v583 = vor.u32 %v581, %v582
    %v584 = vsub.s32 4294967266, %v579
    %v585 = vadd.s32 %v584, 127
    %v586 = vshll.u32 %v585, 23
    %v587 = vor.u32 4788187, %v586
    %v588 = vand.u32 2147483647, %v587
    %v590 = vcvt.s32.f32 %v583
    %v591 = vmul.f32 %v590, %v588
    %v592 = vxor.u32 %v591, 2147483648
    %v593 = vsel %vm510, %v592, %v591
    %v594 = vsub.s32 4, %v570
    %v595 = vsel %vm510, %v594, %v570
    %v596 = vsel %vm509, %v88, %v593
    %v597 = vsel %vm509, 0, %v595
    %v598 = vcosq.f32.pop %v596
    %v599 = vsinq.f32.pop %v596
    %vm600 = vweird.f32 %v88
    %v601 = vadd.s32 %v597, 3
    %v602 = vand.u32 %v601, 3
    %vm603 = vcmp.lt.s32.totalorder %v602, 2
    %vm604 = vcmp.eq.s32.totalorder %v602, 0
    %v605 = vxor.u32 %v599, 2147483648
    %v606 = vsel %vm604, %v598, %v605
    %vm607 = vcmp.eq.s32.totalorder %v602, 2
    %v608 = vxor.u32 %v598, 2147483648
    %v609 = vsel %vm607, %v608, %v599
    %v610 = vsel %vm603, %v606, %v609
    %v611 = vsel %vm600, nan, %v610
    %v612 = vand.u32 2147483647, %v89
    %vm613 = vcmp.le.f32.partialorder %v612, 0.7853982
    %vm614 = vcmp.lt.s32.totalorder %v89, 0
    %v615 = vand.u32 %v89, 2139095040
    %v616 = vshrl.u32 %v615, 23
    %v617 = vsub.s32 %v616, 127
    %v618 = vand.u32 2147483647, %v89
    %v619 = vand.u32 %v618, 8388607
    %v620 = vor.u32 %v619, 8388608
    %v621 = vsub.s32 0, %v620
    %v622 = vadd.s32 %v617, 1
    %vm623 = vcmp.gt.s32.totalorder %v622, 0
    %v624 = vsel %vm623, %v622, 0
    %v625 = vshrl.u32 %v624, 5
    %v626 = vand.u32 %v624, 31
    %v627 = vsub.s32 32, %v626
    %v628 = vshrl.u32 683565275, %v627
    %v629 = vshll.u32 683565275, %v626
    %v630 = vshrl.u32 2475754826, %v627
    %v631 = vor.u32 %v629, %v630
    %v632 = vshll.u32 2475754826, %v626
    %v633 = vshrl.u32 2131351028, %v627
    %v634 = vor.u32 %v632, %v633
    %v635 = vshll.u32 2131351028, %v626
    %v636 = vshrl.u32 2102212464, %v627
    %v637 = vor.u32 %v635, %v636
    %v638 = vshll.u32 2102212464, %v626
    %v639 = vshrl.u32 920167782, %v627
    %v640 = vor.u32 %v638, %v639
    %v641 = vshll.u32 920167782, %v626
    %v642 = vshrl.u32 1326507024, %v627
    %v643 = vor.u32 %v641, %v642
    %vm644 = vcmp.lt.s32.totalorder %v625, 1
    %vm645 = vcmp.lt.s32.totalorder %v625, 2
    %vm646 = vcmp.lt.s32.totalorder %v625, 3
    %vm647 = vcmp.lt.s32.totalorder %v625, 4
    %v648 = vsel %vm644, %v628, %v631
    %v649 = vsel %vm647, %v637, 2102212464
    %v650 = vsel %vm646, %v634, %v649
    %v651 = vsel %vm645, %v648, %v650
    %v652 = vsel %vm644, %v631, %v634
    %v653 = vsel %vm647, %v640, 920167782
    %v654 = vsel %vm646, %v637, %v653
    %v655 = vsel %vm645, %v652, %v654
    %v656 = vsel %vm644, %v634, %v637
    %v657 = vsel %vm647, %v643, 1326507024
    %v658 = vsel %vm646, %v640, %v657
    %v659 = vsel %vm645, %v656, %v658
    %v660 = vshll.u32 %v620, 8
    %v661 = vmul.u32.u64.compose %v660, %v659
    %v662 = vextract.low.u32 %v661
    %v663 = vextract.high.u32 %v661
    %v664 = vmul.u32.u64.compose %v660, %v655
    %v665 = vextract.low.u32 %v664
    %v666 = vextract.high.u32 %v664
    %v667 = vmul.u32 %v660, %v651
    %v668 = vadd.s32 %v663, %v665
    %vm669 = vc.u32 %v663, %v665
    %v670 = vadd.s32 %v666, 1
    %v671 = vsel %vm669, %v670, %v666
    %v672 = vadd.s32 %v667, %v671
    %v673 = vadd.s32 %v672, 536870912
    %v674 = vshrl.u32 %v673, 30
    %v675 = vshll.u32 %v674, 30
    %v676 = vsub.s32 %v672, %v675
    %vm677 = vcmp.lt.s32.totalorder %v676, 0
    %v678 = vsub.s32 0, %v676
    %v679 = vsel %vm677, %v678, %v676
    %v680 = vclz %v679
    %v681 = vsub.s32 %v680, 2
    %vm682 = vcmp.gt.s32.totalorder 0, %v681
    %v683 = vsel %vm682, 0, %v681
    %v684 = vsub.s32 32, %v683
    %v685 = vshll.u32 %v676, %v683
    %v686 = vshrl.u32 %v668, %v684
    %v687 = vor.u32 %v685, %v686
    %v688 = vsub.s32 4294967266, %v683
    %v689 = vadd.s32 %v688, 127
    %v690 = vshll.u32 %v689, 23
    %v691 = vor.u32 4788187, %v690
    %v692 = vand.u32 2147483647, %v691
    %v694 = vcvt.s32.f32 %v687
    %v695 = vmul.f32 %v694, %v692
    %v696 = vxor.u32 %v695, 2147483648
    %v697 = vsel %vm614, %v696, %v695
    %v698 = vsub.s32 4, %v674
    %v699 = vsel %vm614, %v698, %v674
    %v700 = vsel %vm613, %v89, %v697
    %v701 = vsel %vm613, 0, %v699
    %v702 = vcosq.f32.pop %v700
    %v703 = vsinq.f32.pop %v700
    %vm704 = vweird.f32 %v89
    %v705 = vadd.s32 %v701, 3
    %v706 = vand.u32 %v705, 3
    %vm707 = vcmp.lt.s32.totalorder %v706, 2
    %vm708 = vcmp.eq.s32.totalorder %v706, 0
    %v709 = vxor.u32 %v703, 2147483648
    %v710 = vsel %vm708, %v702, %v709
    %vm711 = vcmp.eq.s32.totalorder %v706, 2
    %v712 = vxor.u32 %v702, 2147483648
    %v713 = vsel %vm711, %v712, %v703
    %v714 = vsel %vm707, %v710, %v713
    %v715 = vsel %vm704, nan, %v714
    %v716 = vand.u32 2147483647, %v90
    %vm717 = vcmp.le.f32.partialorder %v716, 0.7853982
    %vm718 = vcmp.lt.s32.totalorder %v90, 0
    %v719 = vand.u32 %v90, 2139095040
    %v720 = vshrl.u32 %v719, 23
    %v721 = vsub.s32 %v720, 127
    %v722 = vand.u32 2147483647, %v90
    %v723 = vand.u32 %v722, 8388607
    %v724 = vor.u32 %v723, 8388608
    %v725 = vsub.s32 0, %v724
    %v726 = vadd.s32 %v721, 1
    %vm727 = vcmp.gt.s32.totalorder %v726, 0
    %v728 = vsel %vm727, %v726, 0
    %v729 = vshrl.u32 %v728, 5
    %v730 = vand.u32 %v728, 31
    %v731 = vsub.s32 32, %v730
    %v732 = vshrl.u32 683565275, %v731
    %v733 = vshll.u32 683565275, %v730
    %v734 = vshrl.u32 2475754826, %v731
    %v735 = vor.u32 %v733, %v734
    %v736 = vshll.u32 2475754826, %v730
    %v737 = vshrl.u32 2131351028, %v731
    %v738 = vor.u32 %v736, %v737
    %v739 = vshll.u32 2131351028, %v730
    %v740 = vshrl.u32 2102212464, %v731
    %v741 = vor.u32 %v739, %v740
    %v742 = vshll.u32 2102212464, %v730
    %v743 = vshrl.u32 920167782, %v731
    %v744 = vor.u32 %v742, %v743
    %v745 = vshll.u32 920167782, %v730
    %v746 = vshrl.u32 1326507024, %v731
    %v747 = vor.u32 %v745, %v746
    %vm748 = vcmp.lt.s32.totalorder %v729, 1
    %vm749 = vcmp.lt.s32.totalorder %v729, 2
    %vm750 = vcmp.lt.s32.totalorder %v729, 3
    %vm751 = vcmp.lt.s32.totalorder %v729, 4
    %v752 = vsel %vm748, %v732, %v735
    %v753 = vsel %vm751, %v741, 2102212464
    %v754 = vsel %vm750, %v738, %v753
    %v755 = vsel %vm749, %v752, %v754
    %v756 = vsel %vm748, %v735, %v738
    %v757 = vsel %vm751, %v744, 920167782
    %v758 = vsel %vm750, %v741, %v757
    %v759 = vsel %vm749, %v756, %v758
    %v760 = vsel %vm748, %v738, %v741
    %v761 = vsel %vm751, %v747, 1326507024
    %v762 = vsel %vm750, %v744, %v761
    %v763 = vsel %vm749, %v760, %v762
    %v764 = vshll.u32 %v724, 8
    %v765 = vmul.u32.u64.compose %v764, %v763
    %v766 = vextract.low.u32 %v765
    %v767 = vextract.high.u32 %v765
    %v768 = vmul.u32.u64.compose %v764, %v759
    %v769 = vextract.low.u32 %v768
    %v770 = vextract.high.u32 %v768
    %v771 = vmul.u32 %v764, %v755
    %v772 = vadd.s32 %v767, %v769
    %vm773 = vc.u32 %v767, %v769
    %v774 = vadd.s32 %v770, 1
    %v775 = vsel %vm773, %v774, %v770
    %v776 = vadd.s32 %v771, %v775
    %v777 = vadd.s32 %v776, 536870912
    %v778 = vshrl.u32 %v777, 30
    %v779 = vshll.u32 %v778, 30
    %v780 = vsub.s32 %v776, %v779
    %vm781 = vcmp.lt.s32.totalorder %v780, 0
    %v782 = vsub.s32 0, %v780
    %v783 = vsel %vm781, %v782, %v780
    %v784 = vclz %v783
    %v785 = vsub.s32 %v784, 2
    %vm786 = vcmp.gt.s32.totalorder 0, %v785
    %v787 = vsel %vm786, 0, %v785
    %v788 = vsub.s32 32, %v787
    %v789 = vshll.u32 %v780, %v787
    %v790 = vshrl.u32 %v772, %v788
    %v791 = vor.u32 %v789, %v790
    %v792 = vsub.s32 4294967266, %v787
    %v793 = vadd.s32 %v792, 127
    %v794 = vshll.u32 %v793, 23
    %v795 = vor.u32 4788187, %v794
    %v796 = vand.u32 2147483647, %v795
    %v798 = vcvt.s32.f32 %v791
    %v799 = vmul.f32 %v798, %v796
    %v800 = vxor.u32 %v799, 2147483648
    %v801 = vsel %vm718, %v800, %v799
    %v802 = vsub.s32 4, %v778
    %v803 = vsel %vm718, %v802, %v778
    %v804 = vsel %vm717, %v90, %v801
    %v805 = vsel %vm717, 0, %v803
    %v806 = vcosq.f32.pop %v804
    %v807 = vsinq.f32.pop %v804
    %vm808 = vweird.f32 %v90
    %v809 = vadd.s32 %v805, 3
    %v810 = vand.u32 %v809, 3
    %vm811 = vcmp.lt.s32.totalorder %v810, 2
    %vm812 = vcmp.eq.s32.totalorder %v810, 0
    %v813 = vxor.u32 %v807, 2147483648
    %v814 = vsel %vm812, %v806, %v813
    %vm815 = vcmp.eq.s32.totalorder %v810, 2
    %v816 = vxor.u32 %v806, 2147483648
    %v817 = vsel %vm815, %v816, %v807
    %v818 = vsel %vm811, %v814, %v817
    %v819 = vsel %vm808, nan, %v818
    %v820 = vand.u32 2147483647, %v91
    %vm821 = vcmp.le.f32.partialorder %v820, 0.7853982
    %vm822 = vcmp.lt.s32.totalorder %v91, 0
    %v823 = vand.u32 %v91, 2139095040
    %v824 = vshrl.u32 %v823, 23
    %v825 = vsub.s32 %v824, 127
    %v826 = vand.u32 2147483647, %v91
    %v827 = vand.u32 %v826, 8388607
    %v828 = vor.u32 %v827, 8388608
    %v829 = vsub.s32 0, %v828
    %v830 = vadd.s32 %v825, 1
    %vm831 = vcmp.gt.s32.totalorder %v830, 0
    %v832 = vsel %vm831, %v830, 0
    %v833 = vshrl.u32 %v832, 5
    %v834 = vand.u32 %v832, 31
    %v835 = vsub.s32 32, %v834
    %v836 = vshrl.u32 683565275, %v835
    %v837 = vshll.u32 683565275, %v834
    %v838 = vshrl.u32 2475754826, %v835
    %v839 = vor.u32 %v837, %v838
    %v840 = vshll.u32 2475754826, %v834
    %v841 = vshrl.u32 2131351028, %v835
    %v842 = vor.u32 %v840, %v841
    %v843 = vshll.u32 2131351028, %v834
    %v844 = vshrl.u32 2102212464, %v835
    %v845 = vor.u32 %v843, %v844
    %v846 = vshll.u32 2102212464, %v834
    %v847 = vshrl.u32 920167782, %v835
    %v848 = vor.u32 %v846, %v847
    %v849 = vshll.u32 920167782, %v834
    %v850 = vshrl.u32 1326507024, %v835
    %v851 = vor.u32 %v849, %v850
    %vm852 = vcmp.lt.s32.totalorder %v833, 1
    %vm853 = vcmp.lt.s32.totalorder %v833, 2
    %vm854 = vcmp.lt.s32.totalorder %v833, 3
    %vm855 = vcmp.lt.s32.totalorder %v833, 4
    %v856 = vsel %vm852, %v836, %v839
    %v857 = vsel %vm855, %v845, 2102212464
    %v858 = vsel %vm854, %v842, %v857
    %v859 = vsel %vm853, %v856, %v858
    %v860 = vsel %vm852, %v839, %v842
    %v861 = vsel %vm855, %v848, 920167782
    %v862 = vsel %vm854, %v845, %v861
    %v863 = vsel %vm853, %v860, %v862
    %v864 = vsel %vm852, %v842, %v845
    %v865 = vsel %vm855, %v851, 1326507024
    %v866 = vsel %vm854, %v848, %v865
    %v867 = vsel %vm853, %v864, %v866
    %v868 = vshll.u32 %v828, 8
    %v869 = vmul.u32.u64.compose %v868, %v867
    %v870 = vextract.low.u32 %v869
    %v871 = vextract.high.u32 %v869
    %v872 = vmul.u32.u64.compose %v868, %v863
    %v873 = vextract.low.u32 %v872
    %v874 = vextract.high.u32 %v872
    %v875 = vmul.u32 %v868, %v859
    %v876 = vadd.s32 %v871, %v873
    %vm877 = vc.u32 %v871, %v873
    %v878 = vadd.s32 %v874, 1
    %v879 = vsel %vm877, %v878, %v874
    %v880 = vadd.s32 %v875, %v879
    %v881 = vadd.s32 %v880, 536870912
    %v882 = vshrl.u32 %v881, 30
    %v883 = vshll.u32 %v882, 30
    %v884 = vsub.s32 %v880, %v883
    %vm885 = vcmp.lt.s32.totalorder %v884, 0
    %v886 = vsub.s32 0, %v884
    %v887 = vsel %vm885, %v886, %v884
    %v888 = vclz %v887
    %v889 = vsub.s32 %v888, 2
    %vm890 = vcmp.gt.s32.totalorder 0, %v889
    %v891 = vsel %vm890, 0, %v889
    %v892 = vsub.s32 32, %v891
    %v893 = vshll.u32 %v884, %v891
    %v894 = vshrl.u32 %v876, %v892
    %v895 = vor.u32 %v893, %v894
    %v896 = vsub.s32 4294967266, %v891
    %v897 = vadd.s32 %v896, 127
    %v898 = vshll.u32 %v897, 23
    %v899 = vor.u32 4788187, %v898
    %v900 = vand.u32 2147483647, %v899
    %v902 = vcvt.s32.f32 %v895
    %v903 = vmul.f32 %v902, %v900
    %v904 = vxor.u32 %v903, 2147483648
    %v905 = vsel %vm822, %v904, %v903
    %v906 = vsub.s32 4, %v882
    %v907 = vsel %vm822, %v906, %v882
    %v908 = vsel %vm821, %v91, %v905
    %v909 = vsel %vm821, 0, %v907
    %v910 = vcosq.f32.pop %v908
    %v911 = vsinq.f32.pop %v908
    %vm912 = vweird.f32 %v91
    %v913 = vadd.s32 %v909, 3
    %v914 = vand.u32 %v913, 3
    %vm915 = vcmp.lt.s32.totalorder %v914, 2
    %vm916 = vcmp.eq.s32.totalorder %v914, 0
    %v917 = vxor.u32 %v911, 2147483648
    %v918 = vsel %vm916, %v910, %v917
    %vm919 = vcmp.eq.s32.totalorder %v914, 2
    %v920 = vxor.u32 %v910, 2147483648
    %v921 = vsel %vm919, %v920, %v911
    %v922 = vsel %vm915, %v918, %v921
    %v923 = vsel %vm912, nan, %v922
    %v924 = vmul.f32 %v32, %v195
    %v925 = vmul.f32 %v33, %v299
    %v926 = vmul.f32 %v34, %v403
    %v927 = vmul.f32 %v35, %v507
    %v928 = vmul.f32 %v36, %v611
    %v929 = vmul.f32 %v37, %v715
    %v930 = vmul.f32 %v38, %v819
    %v931 = vmul.f32 %v39, %v923
    %s932 = scalar_lea.vmem %s0, %s21
    %v933 = vld [vmem:[%s932] sm:$0x1]
    %vm934 = vcmask 261120
    %v936 = vsel %vm934, %v933, 0
    %938 = vmatprep.subr.mxu0 %v925
    %939 = vmatpush1.msra.mxu0 %v924
    %940 = vmatprep.subr.mxu0 %v927
    %941 = vmatpush1.msra.mxu0 %v926
    %942 = vmatprep.subr.mxu0 %v929
    %943 = vmatpush1.msra.mxu0 %v928
    %944 = vmatprep.subr.mxu0 %v931
    %945 = vmatpush1.msra.mxu0 %v930
    %946 = vmatprep.subr.mxu0 0.0
    %947 = vmatpush1.msra.mxu0 0.0
    %948 = vmatprep.subr.mxu0 0.0
    %949 = vmatpush1.msra.mxu0 0.0
    %950 = vmatprep.subr.mxu0 0.0
    %951 = vmatpush1.msra.mxu0 0.0
    %952 = vmatprep.subr.mxu0 0.0
    %953 = vmatpush1.msra.mxu0 0.0
    %954 = vmatprep.subr.mxu0 0.0
    %955 = vmatpush1.msra.mxu0 0.0
    %956 = vmatprep.subr.mxu0 0.0
    %957 = vmatpush1.msra.mxu0 0.0
    %958 = vmatprep.subr.mxu0 0.0
    %959 = vmatpush1.msra.mxu0 0.0
    %960 = vmatprep.subr.mxu0 0.0
    %961 = vmatpush1.msra.mxu0 0.0
    %962 = vmatprep.subr.mxu0 0.0
    %963 = vmatpush1.msra.mxu0 0.0
    %964 = vmatprep.subr.mxu0 0.0
    %965 = vmatpush1.msra.mxu0 0.0
    %966 = vmatprep.subr.mxu0 0.0
    %967 = vmatpush1.msra.mxu0 0.0
    %968 = vmatprep.subr.mxu0 0.0
    %969 = vmatpush1.msra.mxu0 0.0
    %970 = vmatprep.subr.mxu0 0.0
    %971 = vmatpush1.msra.mxu0 0.0
    %972 = vmatprep.subr.mxu0 0.0
    %973 = vmatpush1.msra.mxu0 0.0
    %974 = vmatprep.subr.mxu0 0.0
    %975 = vmatpush1.msra.mxu0 0.0
    %976 = vmatprep.subr.mxu0 0.0
    %977 = vmatpush1.msra.mxu0 0.0
    %978 = vmatprep.subr.mxu0 0.0
    %979 = vmatpush1.msra.mxu0 0.0
    %980 = vmatprep.subr.mxu0 0.0
    %981 = vmatpush1.msra.mxu0 0.0
    %982 = vmatprep.subr.mxu0 0.0
    %983 = vmatpush1.msra.mxu0 0.0
    %984 = vmatprep.subr.mxu0 0.0
    %985 = vmatpush1.msra.mxu0 0.0
    %986 = vmatprep.subr.mxu0 0.0
    %987 = vmatpush1.msra.mxu0 0.0
    %988 = vmatprep.subr.mxu0 0.0
    %989 = vmatpush1.msra.mxu0 0.0
    %990 = vmatprep.subr.mxu0 0.0
    %991 = vmatpush1.msra.mxu0 0.0
    %992 = vmatprep.subr.mxu0 0.0
    %993 = vmatpush1.msra.mxu0 0.0
    %994 = vmatprep.subr.mxu0 0.0
    %995 = vmatpush1.msra.mxu0 0.0
    %996 = vmatprep.subr.mxu0 0.0
    %997 = vmatpush1.msra.mxu0 0.0
    %998 = vmatprep.subr.mxu0 0.0
    %999 = vmatpush1.msra.mxu0 0.0
    %1000 = vmatprep.subr.mxu0 0.0
    %1001 = vmatpush1.msra.mxu0 0.0
    %1002 = vmatprep.mubr.f32.mxu0 0.0
    %1003 = vmatmul.mubr.f32.gmra.mrb[0].mxu0 %v936
    %v1004 = vpop.f32.mrb[0].mxu0
    %v1005 = vadd.f32 0.0, %v1004
    %v1006 = vpop.f32.mrb[0].mxu0
    %v1007 = vadd.f32 0.0, %v1006
    %1008 = vdwg.mxu0
    %v1011 = vcombine.low %v1005, %v1007
    %v1013 = vunpack.c.l.s4 1966171168
    %v1014 = vunpack.c.0.s8 %v1013
    %v1015 = vlaneseq
    %v1016 = vshrl.u32 %v1015, 7
    %v1017 = vsub.s32 %v1014, %v1016
    %v1018 = vrot.slane %v1011, %v1017
    %v1020 = vunpack.c.l.s4 1966171168
    %v1021 = vunpack.c.0.s8 %v1020
    %v1022 = vlaneseq
    %v1023 = vshrl.u32 %v1022, 7
    %v1024 = vsub.s32 %v1021, %v1023
    %v1025 = vrot.slane %v1018, %v1024
    %s1027 = smul.u32 %s21, 2
    %s1028 = scalar_lea.vmem %s5, %s1027
    %v1029 = vlaneseq
    %vm1030 = vcmp.ge.s32.totalorder %v1029, 0
    %vm1031 = vcmp.lt.s32.totalorder %v1029, 256
    %vm1032 = vmand %vm1030, %vm1031
    %1033 = vst.msk [vmem:[%s1028] sm:$0x3] %vm1032, %v1025
  $region26: #{trescal_forward.1} parent=0 // loop_footer
    %s25 = sadd.s32 1, %s21
  $region27: #{trescal_forward.1} parent=0 // loop_footer_branch
    %20 = sbr.rel target = $region23
  $region28: #{trescal_forward.1} parent=0 // loop_exit
    _
  // Predicated region
  $region29: #{trescal_forward.1} parent=0 // pred_check
    _
  $region30: #{trescal_forward.1} parent=0 // pred_check_branch
    %1035 = sbr.rel (0) target = $region32
  $region31: #{trescal_forward.1} parent=0 // pred_region
    _
  $region32: #{trescal_forward.1} parent=0 // pred_fallthru
    _
  // Predicated region
  $region33: #{trescal_forward.1} parent=0 // pred_check
    _
  $region34: #{trescal_forward.1} parent=0 // pred_check_branch
    %1037 = sbr.rel (0) target = $region36
  $region35: #{trescal_forward.1} parent=0 // pred_region
    _
  $region36: #{trescal_forward.1} parent=0 // pred_fallthru
    _

</llo_original>
